<compile_context>
chip_gen: v7x
topology: tpu7x:2x2x1
jax: 0.10.0
libtpu: 0.0.40
codegen_flags: <defaults>
</compile_context>

<pallas_src>
import jax
import jax.numpy as jnp
from jax.experimental import pallas as pl
from jax.experimental.pallas import tpu as pltpu


def _round_up(n, m):
    return ((n + m - 1) // m) * m


def _softmax_last(x):
    m = jnp.max(x, axis=-1, keepdims=True)
    e = jnp.exp(x - m)
    s = jnp.sum(e, axis=-1, keepdims=True)
    return e / s


def gating_kernel(x_ref,
                  w1_ref, b1_ref,
                  w2_ref, b2_ref,
                  w3_ref, b3_ref,
                  w4_ref, b4_ref,
                  noise_ref,
                  out_ref):
    bf16 = jnp.bfloat16

    # layer1 + relu   (dropout1 = identity, eval mode)
    h = jnp.dot(x_ref[...], w1_ref[...],
                preferred_element_type=jnp.float32) + b1_ref[...]
    h = jnp.maximum(h, 0.0)

    # layer2 + leaky_relu (slope 0.01)   (dropout2 = identity)
    h = jnp.dot(h.astype(bf16), w2_ref[...],
                preferred_element_type=jnp.float32) + b2_ref[...]
    h = jnp.where(h >= 0.0, h, 0.01 * h)

    # layer3 + leaky_relu   (dropout3 = identity)
    h = jnp.dot(h.astype(bf16), w3_ref[...],
                preferred_element_type=jnp.float32) + b3_ref[...]
    h = jnp.where(h >= 0.0, h, 0.01 * h)

    # layer4 -> softmax over experts, add noise, softmax again.
    logits = jnp.dot(h.astype(bf16), w4_ref[...],
                     preferred_element_type=jnp.float32) + b4_ref[...]
    weights = _softmax_last(logits)
    out_ref[...] = _softmax_last(weights + noise_ref[...])

    # TODO(synk): dropout is omitted (module evaluated in eval mode); training
    # mode would need pltpu.prng_seed + pltpu.stateful_bernoulli masks.


def prepare_params(params):
    """One-time preprocessing: cast matmul weights to bf16, biases to f32.

    Hoisted out of gating_forward so repeated calls don't re-run the casts as
    separate XLA kernels every forward pass.
    """
    bf16 = jnp.bfloat16
    prepped = {}
    for i in (1, 2, 3, 4):
        prepped[f"w{i}"] = params[f"w{i}"].astype(bf16)
        prepped[f"b{i}"] = params[f"b{i}"].astype(jnp.float32)
    return prepped


def _choose_batch_tiling(B, block_b):
    """Pick (TB, n_blocks): TB multiple of 8, >=2 blocks when B>=16 (v7x),
    and last-block padding kept small for awkward batch sizes."""
    B8 = _round_up(B, 8)
    n_blocks = pl.cdiv(B8, block_b)
    if B8 >= 16:
        n_blocks = max(n_blocks, 2)   # both v7x TensorCores get work
    TB = _round_up(pl.cdiv(B8, n_blocks), 8)
    n_blocks = pl.cdiv(B8, TB)
    return TB, n_blocks


def gating_forward(x, params, noise, *, block_b=2048):
    """x: [B, D_in] f32; params: output of prepare_params; noise: [B, E] f32."""
    B, D_in = x.shape
    E = noise.shape[1]
    bf16 = jnp.bfloat16

    w1, w2, w3, w4 = params["w1"], params["w2"], params["w3"], params["w4"]
    b1, b2, b3, b4 = params["b1"], params["b2"], params["b3"], params["b4"]
    h1, h2, h3 = w1.shape[1], w2.shape[1], w3.shape[1]

    TB, n_blocks = _choose_batch_tiling(B, block_b)
    B_pad = TB * n_blocks

    x_p = x.astype(bf16)
    noise_p = noise.astype(jnp.float32)
    if B_pad != B:
        # Padded rows are zeros; they produce finite (uniform) softmax rows in
        # the padded tail of the output, which is sliced off below.
        pad = B_pad - B
        x_p = jnp.pad(x_p, ((0, pad), (0, 0)))
        noise_p = jnp.pad(noise_p, ((0, pad), (0, 0)))

    def row_spec(ncols):                       # batch-tiled operands
        return pl.BlockSpec((TB, ncols), lambda i: (i, 0))

    def resident(arr):                         # VMEM-resident weights/biases
        return pl.BlockSpec(arr.shape, lambda i: (0, 0))

    flops = 2 * B_pad * (D_in * h1 + h1 * h2 + h2 * h3 + h3 * E)
    bytes_accessed = (x_p.size * 2 + noise_p.size * 4
                      + (w1.size + w2.size + w3.size + w4.size) * 2
                      + (b1.size + b2.size + b3.size + b4.size) * 4
                      + B_pad * E * 4)
    cost = pl.CostEstimate(flops=flops,
                           transcendentals=2 * B_pad * E,
                           bytes_accessed=bytes_accessed)

    out = pl.pallas_call(
        gating_kernel,
        out_shape=jax.ShapeDtypeStruct((B_pad, E), jnp.float32),
        grid=(n_blocks,),
        in_specs=[
            row_spec(D_in),
            resident(w1), resident(b1),
            resident(w2), resident(b2),
            resident(w3), resident(b3),
            resident(w4), resident(b4),
            row_spec(E),
        ],
        out_specs=row_spec(E),
        compiler_params=pltpu.CompilerParams(
            dimension_semantics=("parallel",),
            vmem_limit_bytes=32 * 1024 * 1024,
        ),
        cost_estimate=cost,
    )(x_p, w1, b1, w2, b2, w3, b3, w4, b4, noise_p)

    return out[:B] if B_pad != B else out


def init_params(key, input_dim, num_experts):
    """Deterministic synthetic parameters (PyTorch-Linear-like init/shapes)."""
    dims = [(input_dim, 128), (128, 256), (256, 128), (128, num_experts)]
    params = {}
    for i, (fan_in, fan_out) in enumerate(dims, start=1):
        key, kw, kb = jax.random.split(key, 3)
        bound = 1.0 / jnp.sqrt(float(fan_in))
        params[f"w{i}"] = jax.random.uniform(
            kw, (fan_in, fan_out), jnp.float32, -bound, bound)
        params[f"b{i}"] = jax.random.uniform(
            kb, (1, fan_out), jnp.float32, -bound, bound)
    return params


def gating_reference(x, params, noise):
    """Pure-JAX reference with the same bf16-operand / f32-accum matmuls."""
    bf16 = jnp.bfloat16

    def dot(a, w):
        return jnp.dot(a.astype(bf16), w.astype(bf16),
                       preferred_element_type=jnp.float32)

    h = jnp.maximum(dot(x, params["w1"]) + params["b1"], 0.0)
    h = dot(h, params["w2"]) + params["b2"]
    h = jnp.where(h >= 0.0, h, 0.01 * h)
    h = dot(h, params["w3"]) + params["b3"]
    h = jnp.where(h >= 0.0, h, 0.01 * h)
    logits = dot(h, params["w4"]) + params["b4"]
    w = jax.nn.softmax(logits, axis=1)
    return jax.nn.softmax(w + noise, axis=1)


if __name__ == "__main__":
    INPUT_DIM, NUM_EXPERTS = 32, 8

    key = jax.random.PRNGKey(0)
    kx, kn, kp, kx2, kn2 = jax.random.split(key, 5)

    params = init_params(kp, INPUT_DIM, NUM_EXPERTS)
    prepped = prepare_params(params)

    # Primary small-shape run (B=8 -> single grid block, no padding).
    B = 8
    x = jax.random.normal(kx, (B, INPUT_DIM), jnp.float32)
    noise = jax.random.normal(kn, (B, NUM_EXPERTS), jnp.float32) * 0.01
    out = jax.block_until_ready(gating_forward(x, prepped, noise))
    ref = gating_reference(x, params, noise)
    assert out.shape == (B, NUM_EXPERTS)
    assert jnp.allclose(out, ref, atol=2e-3, rtol=2e-3), "mismatch vs JAX reference"
    assert jnp.allclose(jnp.sum(out, axis=1), 1.0, atol=1e-4), "rows must sum to 1"

    # Secondary check: multi-block grid (v7x 2-TC path) with batch padding.
    B2 = 24
    x2 = jax.random.normal(kx2, (B2, INPUT_DIM), jnp.float32)
    noise2 = jax.random.normal(kn2, (B2, NUM_EXPERTS), jnp.float32) * 0.01
    out2 = jax.block_until_ready(gating_forward(x2, prepped, noise2))
    ref2 = gating_reference(x2, params, noise2)
    assert out2.shape == (B2, NUM_EXPERTS)
    assert jnp.allclose(out2, ref2, atol=2e-3, rtol=2e-3), "mismatch vs JAX reference (multi-block)"
    assert jnp.allclose(jnp.sum(out2, axis=1), 1.0, atol=1e-4), "rows must sum to 1 (multi-block)"

    print("KERNEL_OK")
</pallas_src>

<mosaic_0001>
module attributes {stable_mosaic.version = 11 : i64} {
  func.func @gating_kernel(%arg0: i32, %arg1: memref<8x32xbf16, #tpu.memory_space<vmem>>, %arg2: memref<32x128xbf16, #tpu.memory_space<vmem>>, %arg3: memref<1x128xf32, #tpu.memory_space<vmem>>, %arg4: memref<128x256xbf16, #tpu.memory_space<vmem>>, %arg5: memref<1x256xf32, #tpu.memory_space<vmem>>, %arg6: memref<256x128xbf16, #tpu.memory_space<vmem>>, %arg7: memref<1x128xf32, #tpu.memory_space<vmem>>, %arg8: memref<128x8xbf16, #tpu.memory_space<vmem>>, %arg9: memref<1x8xf32, #tpu.memory_space<vmem>>, %arg10: memref<8x8xf32, #tpu.memory_space<vmem>>, %arg11: memref<8x8xf32, #tpu.memory_space<vmem>>) attributes {dimension_semantics = [#tpu.dimension_semantics<parallel>], iteration_bounds = array<i64: 1>, scalar_prefetch = 0 : i64, scratch_operands = 0 : i64, tpu.core_type = #tpu.core_type<tc>, window_params = [{transform_indices = @transform_0, window_bounds = array<i64: 8, 32>}, {pipeline_mode = #tpu.pipeline_mode<synchronous>, transform_indices = @transform_1, window_bounds = array<i64: 32, 128>}, {pipeline_mode = #tpu.pipeline_mode<synchronous>, transform_indices = @transform_2, window_bounds = array<i64: 1, 128>}, {pipeline_mode = #tpu.pipeline_mode<synchronous>, transform_indices = @transform_3, window_bounds = array<i64: 128, 256>}, {pipeline_mode = #tpu.pipeline_mode<synchronous>, transform_indices = @transform_4, window_bounds = array<i64: 1, 256>}, {pipeline_mode = #tpu.pipeline_mode<synchronous>, transform_indices = @transform_5, window_bounds = array<i64: 256, 128>}, {pipeline_mode = #tpu.pipeline_mode<synchronous>, transform_indices = @transform_6, window_bounds = array<i64: 1, 128>}, {pipeline_mode = #tpu.pipeline_mode<synchronous>, transform_indices = @transform_7, window_bounds = array<i64: 128, 8>}, {pipeline_mode = #tpu.pipeline_mode<synchronous>, transform_indices = @transform_8, window_bounds = array<i64: 1, 8>}, {transform_indices = @transform_9, window_bounds = array<i64: 8, 8>}, {transform_indices = @transform_10, window_bounds = array<i64: 8, 8>}]} {
    %c0 = arith.constant 0 : index
    %c0_0 = arith.constant 0 : index
    %0 = vector.load %arg1[%c0, %c0_0] : memref<8x32xbf16, #tpu.memory_space<vmem>>, vector<8x32xbf16>
    %c0_1 = arith.constant 0 : index
    %c0_2 = arith.constant 0 : index
    %1 = vector.load %arg2[%c0_1, %c0_2] : memref<32x128xbf16, #tpu.memory_space<vmem>>, vector<32x128xbf16>
    %cst = arith.constant dense<0.000000e+00> : vector<8x128xf32>
    %2 = tpu.matmul %0, %1, %cst {dimension_numbers = #tpu.dot_dimension_numbers<[1], [0], [0], [1], [0, 0, 1, 1], [], []>} : vector<8x32xbf16>, vector<32x128xbf16>, vector<8x128xf32> -> vector<8x128xf32>
    %c0_3 = arith.constant 0 : index
    %c0_4 = arith.constant 0 : index
    %3 = vector.load %arg3[%c0_3, %c0_4] : memref<1x128xf32, #tpu.memory_space<vmem>>, vector<1x128xf32>
    %4 = vector.broadcast %3 : vector<1x128xf32> to vector<8x128xf32>
    %5 = arith.addf %2, %4 : vector<8x128xf32>
    %cst_5 = arith.constant 0.000000e+00 : f32
    %6 = vector.broadcast %cst_5 : f32 to vector<8x128xf32>
    %7 = arith.maximumf %5, %6 : vector<8x128xf32>
    %8 = arith.truncf %7 : vector<8x128xf32> to vector<8x128xbf16>
    %c0_6 = arith.constant 0 : index
    %c0_7 = arith.constant 0 : index
    %9 = vector.load %arg4[%c0_6, %c0_7] : memref<128x256xbf16, #tpu.memory_space<vmem>>, vector<128x256xbf16>
    %cst_8 = arith.constant dense<0.000000e+00> : vector<8x256xf32>
    %10 = tpu.matmul %8, %9, %cst_8 {dimension_numbers = #tpu.dot_dimension_numbers<[1], [0], [0], [1], [0, 0, 1, 1], [], []>} : vector<8x128xbf16>, vector<128x256xbf16>, vector<8x256xf32> -> vector<8x256xf32>
    %c0_9 = arith.constant 0 : index
    %c0_10 = arith.constant 0 : index
    %11 = vector.load %arg5[%c0_9, %c0_10] : memref<1x256xf32, #tpu.memory_space<vmem>>, vector<1x256xf32>
    %12 = vector.broadcast %11 : vector<1x256xf32> to vector<8x256xf32>
    %13 = arith.addf %10, %12 : vector<8x256xf32>
    %cst_11 = arith.constant 0.000000e+00 : f32
    %14 = vector.broadcast %cst_11 : f32 to vector<8x256xf32>
    %15 = arith.cmpf oge, %13, %14 : vector<8x256xf32>
    %cst_12 = arith.constant 0.00999999977 : f32
    %16 = vector.broadcast %cst_12 : f32 to vector<8x256xf32>
    %17 = arith.mulf %16, %13 : vector<8x256xf32>
    %18 = arith.select %15, %13, %17 : vector<8x256xi1>, vector<8x256xf32>
    %19 = arith.truncf %18 : vector<8x256xf32> to vector<8x256xbf16>
    %c0_13 = arith.constant 0 : index
    %c0_14 = arith.constant 0 : index
    %20 = vector.load %arg6[%c0_13, %c0_14] : memref<256x128xbf16, #tpu.memory_space<vmem>>, vector<256x128xbf16>
    %cst_15 = arith.constant dense<0.000000e+00> : vector<8x128xf32>
    %21 = tpu.matmul %19, %20, %cst_15 {dimension_numbers = #tpu.dot_dimension_numbers<[1], [0], [0], [1], [0, 0, 1, 1], [], []>} : vector<8x256xbf16>, vector<256x128xbf16>, vector<8x128xf32> -> vector<8x128xf32>
    %c0_16 = arith.constant 0 : index
    %c0_17 = arith.constant 0 : index
    %22 = vector.load %arg7[%c0_16, %c0_17] : memref<1x128xf32, #tpu.memory_space<vmem>>, vector<1x128xf32>
    %23 = vector.broadcast %22 : vector<1x128xf32> to vector<8x128xf32>
    %24 = arith.addf %21, %23 : vector<8x128xf32>
    %cst_18 = arith.constant 0.000000e+00 : f32
    %25 = vector.broadcast %cst_18 : f32 to vector<8x128xf32>
    %26 = arith.cmpf oge, %24, %25 : vector<8x128xf32>
    %cst_19 = arith.constant 0.00999999977 : f32
    %27 = vector.broadcast %cst_19 : f32 to vector<8x128xf32>
    %28 = arith.mulf %27, %24 : vector<8x128xf32>
    %29 = arith.select %26, %24, %28 : vector<8x128xi1>, vector<8x128xf32>
    %30 = arith.truncf %29 : vector<8x128xf32> to vector<8x128xbf16>
    %c0_20 = arith.constant 0 : index
    %c0_21 = arith.constant 0 : index
    %31 = vector.load %arg8[%c0_20, %c0_21] : memref<128x8xbf16, #tpu.memory_space<vmem>>, vector<128x8xbf16>
    %cst_22 = arith.constant dense<0.000000e+00> : vector<8x8xf32>
    %32 = tpu.matmul %30, %31, %cst_22 {dimension_numbers = #tpu.dot_dimension_numbers<[1], [0], [0], [1], [0, 0, 1, 1], [], []>} : vector<8x128xbf16>, vector<128x8xbf16>, vector<8x8xf32> -> vector<8x8xf32>
    %c0_23 = arith.constant 0 : index
    %c0_24 = arith.constant 0 : index
    %33 = vector.load %arg9[%c0_23, %c0_24] : memref<1x8xf32, #tpu.memory_space<vmem>>, vector<1x8xf32>
    %34 = vector.broadcast %33 : vector<1x8xf32> to vector<8x8xf32>
    %35 = arith.addf %32, %34 : vector<8x8xf32>
    %cst_25 = arith.constant dense<0xFF800000> : vector<8xf32>
    %36 = vector.multi_reduction <maximumf>, %35, %cst_25 [1] : vector<8x8xf32> to vector<8xf32>
    %37 = vector.shape_cast %36 : vector<8xf32> to vector<8x1xf32>
    %38 = vector.broadcast %37 : vector<8x1xf32> to vector<8x8xf32>
    %39 = arith.subf %35, %38 : vector<8x8xf32>
    %40 = math.exp %39 : vector<8x8xf32>
    %cst_26 = arith.constant dense<0.000000e+00> : vector<8xf32>
    %41 = vector.multi_reduction <add>, %40, %cst_26 [1] : vector<8x8xf32> to vector<8xf32>
    %42 = vector.shape_cast %41 : vector<8xf32> to vector<8x1xf32>
    %43 = vector.broadcast %42 : vector<8x1xf32> to vector<8x8xf32>
    %44 = arith.divf %40, %43 : vector<8x8xf32>
    %c0_27 = arith.constant 0 : index
    %c0_28 = arith.constant 0 : index
    %45 = vector.load %arg10[%c0_27, %c0_28] : memref<8x8xf32, #tpu.memory_space<vmem>>, vector<8x8xf32>
    %46 = arith.addf %44, %45 : vector<8x8xf32>
    %cst_29 = arith.constant dense<0xFF800000> : vector<8xf32>
    %47 = vector.multi_reduction <maximumf>, %46, %cst_29 [1] : vector<8x8xf32> to vector<8xf32>
    %48 = vector.shape_cast %47 : vector<8xf32> to vector<8x1xf32>
    %49 = vector.broadcast %48 : vector<8x1xf32> to vector<8x8xf32>
    %50 = arith.subf %46, %49 : vector<8x8xf32>
    %51 = math.exp %50 : vector<8x8xf32>
    %cst_30 = arith.constant dense<0.000000e+00> : vector<8xf32>
    %52 = vector.multi_reduction <add>, %51, %cst_30 [1] : vector<8x8xf32> to vector<8xf32>
    %53 = vector.shape_cast %52 : vector<8xf32> to vector<8x1xf32>
    %54 = vector.broadcast %53 : vector<8x1xf32> to vector<8x8xf32>
    %55 = arith.divf %51, %54 : vector<8x8xf32>
    %c0_31 = arith.constant 0 : index
    %c0_32 = arith.constant 0 : index
    %56 = vector.load %arg11[%c0_31, %c0_32] : memref<8x8xf32, #tpu.memory_space<vmem>>, vector<8x8xf32>
    tpu.vector_store %arg11[%c0_31, %c0_32], %55 {strides = array<i32>} : memref<8x8xf32, #tpu.memory_space<vmem>>, vector<8x8xf32>,
    return
  }
  func.func @transform_0(%arg0: i32) -> (i32, i32) {
    %c0_i32 = arith.constant 0 : i32
    %c0_i32_0 = arith.constant 0 : i32
    return %arg0, %c0_i32 : i32, i32
  }
  func.func @transform_1(%arg0: i32) -> (i32, i32) {
    %c0_i32 = arith.constant 0 : i32
    %c0_i32_0 = arith.constant 0 : i32
    %c0_i32_1 = arith.constant 0 : i32
    return %c0_i32, %c0_i32_0 : i32, i32
  }
  func.func @transform_2(%arg0: i32) -> (i32, i32) {
    %c0_i32 = arith.constant 0 : i32
    %c0_i32_0 = arith.constant 0 : i32
    %c0_i32_1 = arith.constant 0 : i32
    return %c0_i32, %c0_i32_0 : i32, i32
  }
  func.func @transform_3(%arg0: i32) -> (i32, i32) {
    %c0_i32 = arith.constant 0 : i32
    %c0_i32_0 = arith.constant 0 : i32
    %c0_i32_1 = arith.constant 0 : i32
    return %c0_i32, %c0_i32_0 : i32, i32
  }
  func.func @transform_4(%arg0: i32) -> (i32, i32) {
    %c0_i32 = arith.constant 0 : i32
    %c0_i32_0 = arith.constant 0 : i32
    %c0_i32_1 = arith.constant 0 : i32
    return %c0_i32, %c0_i32_0 : i32, i32
  }
  func.func @transform_5(%arg0: i32) -> (i32, i32) {
    %c0_i32 = arith.constant 0 : i32
    %c0_i32_0 = arith.constant 0 : i32
    %c0_i32_1 = arith.constant 0 : i32
    return %c0_i32, %c0_i32_0 : i32, i32
  }
  func.func @transform_6(%arg0: i32) -> (i32, i32) {
    %c0_i32 = arith.constant 0 : i32
    %c0_i32_0 = arith.constant 0 : i32
    %c0_i32_1 = arith.constant 0 : i32
    return %c0_i32, %c0_i32_0 : i32, i32
  }
  func.func @transform_7(%arg0: i32) -> (i32, i32) {
    %c0_i32 = arith.constant 0 : i32
    %c0_i32_0 = arith.constant 0 : i32
    %c0_i32_1 = arith.constant 0 : i32
    return %c0_i32, %c0_i32_0 : i32, i32
  }
  func.func @transform_8(%arg0: i32) -> (i32, i32) {
    %c0_i32 = arith.constant 0 : i32
    %c0_i32_0 = arith.constant 0 : i32
    %c0_i32_1 = arith.constant 0 : i32
    return %c0_i32, %c0_i32_0 : i32, i32
  }
  func.func @transform_9(%arg0: i32) -> (i32, i32) {
    %c0_i32 = arith.constant 0 : i32
    %c0_i32_0 = arith.constant 0 : i32
    return %arg0, %c0_i32 : i32, i32
  }
  func.func @transform_10(%arg0: i32) -> (i32, i32) {
    %c0_i32 = arith.constant 0 : i32
    %c0_i32_0 = arith.constant 0 : i32
    return %arg0, %c0_i32 : i32, i32
  }
}

</mosaic_0001>

<llo_original>
// kernel: tpu_custom_call.1
$region0: #{tpu_custom_call.1}
  #allocation0 [shape = 'u32[]', space=smem, size = 0x4, offset = 0x4, fixed_abs, tag = 'smem constant byte address 0x4 - core index']
  #allocation1 [shape = 'u32[144,128]{1,0:T(1,128)}', space=vmem, size = 0x12000, scoped, tag = 'internal scratch']
  %s0 = inlined_call_operand.vmem [shape: bf16[8,32], index: 0, kind: input, shape index: {}]
  %s1 = inlined_call_operand.vmem [shape: bf16[32,128], index: 1, kind: input, shape index: {}]
  %s2 = inlined_call_operand.vmem [shape: f32[1,128], index: 2, kind: input, shape index: {}]
  %s3 = inlined_call_operand.hbm [shape: bf16[128,256], index: 3, kind: input, shape index: {}]
  %s4 = inlined_call_operand.vmem [shape: f32[1,256], index: 4, kind: input, shape index: {}]
  %s5 = inlined_call_operand.hbm [shape: bf16[256,128], index: 5, kind: input, shape index: {}]
  %s6 = inlined_call_operand.vmem [shape: f32[1,128], index: 6, kind: input, shape index: {}]
  %s7 = inlined_call_operand.vmem [shape: bf16[128,8], index: 7, kind: input, shape index: {}]
  %s8 = inlined_call_operand.vmem [shape: f32[1,8], index: 8, kind: input, shape index: {}]
  %s9 = inlined_call_operand.vmem [shape: f32[8,8], index: 9, kind: input, shape index: {}]
  %s10 = inlined_call_operand.hbm [shape: f32[8,8], index: 10, kind: output, shape index: {}]
  %s11 = sld [smem:[#allocation0]]
  $region58: #{tpu_custom_call.1} parent=0
    _
  %s13 = ssub.s32 1, %s11
  %s14 = scalar_select 0, %s13, %s11
  $region1: #{tpu_custom_call.1} parent=0
    #allocation2 [shape = 'u8[65536]{0}', space=vmem, size = 0x10000, scoped, tag = 'input window, operand 3, single buffered']
    #allocation3 [shape = 's32[1]{0}', space=sflag, size = 0x4, scoped, tag = 'scoped memory for tpu_custom_call.1']
    #allocation4 [shape = 's32[1]{0}', space=sflag, size = 0x4, scoped, tag = 'scoped memory for tpu_custom_call.1']
    #allocation5 [shape = 'u8[65536]{0}', space=vmem, size = 0x10000, scoped, tag = 'input window, operand 5, single buffered']
    #allocation6 [shape = 's32[1]{0}', space=sflag, size = 0x4, scoped, tag = 'scoped memory for tpu_custom_call.1']
    #allocation7 [shape = 'u8[4096]{0}', space=vmem, size = 0x1000, scoped, tag = 'output window, operand 0, single buffered']
    %15 = vsyncpa [#allocation3], 0
    %16 = vsyncpa [#allocation6], 0
    %17 = vsyncpa [#allocation4], 0
    // Predicated region
    $region2: #{tpu_custom_call.1} parent=1 // pred_check
      _
    $region3: #{tpu_custom_call.1} parent=1 // pred_check_branch
      %19 = sbr.rel (0) target = $region5
    $region4: #{tpu_custom_call.1} parent=1 // pred_region
      _
    $region5: #{tpu_custom_call.1} parent=1 // pred_fallthru
      _
    // Predicated region
    $region6: #{tpu_custom_call.1} parent=1 // pred_check
      _
    $region7: #{tpu_custom_call.1} parent=1 // pred_check_branch
      %21 = sbr.rel (0) target = $region9
    $region8: #{tpu_custom_call.1} parent=1 // pred_region
      _
    $region9: #{tpu_custom_call.1} parent=1 // pred_fallthru
      _
    // Predicated region
    $region10: #{tpu_custom_call.1} parent=1 // pred_check
      _
    $region11: #{tpu_custom_call.1} parent=1 // pred_check_branch
      %23 = sbr.rel (0) target = $region13
    $region12: #{tpu_custom_call.1} parent=1 // pred_region
      _
    $region13: #{tpu_custom_call.1} parent=1 // pred_fallthru
      _
    // Predicated region
    $region14: #{tpu_custom_call.1} parent=1 // pred_check
      _
    $region15: #{tpu_custom_call.1} parent=1 // pred_check_branch
      %25 = sbr.rel (0) target = $region17
    $region16: #{tpu_custom_call.1} parent=1 // pred_region
      %s27 = ssub.s32 2048, 2048
      %28 = vsyncadd [#allocation3], %s27
      %s29 = sshll.u32 [#allocation2], 4
      %s30 = int_to_ptr.vmem [resolvable:$true] %s29
      %35 = dma.hbm_to_vmem [thread:$0]  %s3, 2048, %s30, [#allocation3], 128, 128, 8
    $region17: #{tpu_custom_call.1} parent=1 // pred_fallthru
      _
    // Predicated region
    $region18: #{tpu_custom_call.1} parent=1 // pred_check
      _
    $region19: #{tpu_custom_call.1} parent=1 // pred_check_branch
      %37 = sbr.rel (0) target = $region21
    $region20: #{tpu_custom_call.1} parent=1 // pred_region
      _
    $region21: #{tpu_custom_call.1} parent=1 // pred_fallthru
      _
    // Predicated region
    $region22: #{tpu_custom_call.1} parent=1 // pred_check
      _
    $region23: #{tpu_custom_call.1} parent=1 // pred_check_branch
      %39 = sbr.rel (0) target = $region25
    $region24: #{tpu_custom_call.1} parent=1 // pred_region
      %s41 = ssub.s32 2048, 2048
      %42 = vsyncadd [#allocation6], %s41
      %s43 = sshll.u32 [#allocation5], 4
      %s44 = int_to_ptr.vmem [resolvable:$true] %s43
      %49 = dma.hbm_to_vmem [thread:$0]  %s5, 2048, %s44, [#allocation6], 64, 64, 4
    $region25: #{tpu_custom_call.1} parent=1 // pred_fallthru
      _
    // Predicated region
    $region26: #{tpu_custom_call.1} parent=1 // pred_check
      _
    $region27: #{tpu_custom_call.1} parent=1 // pred_check_branch
      %51 = sbr.rel (0) target = $region29
    $region28: #{tpu_custom_call.1} parent=1 // pred_region
      _
    $region29: #{tpu_custom_call.1} parent=1 // pred_fallthru
      _
    // Predicated region
    $region30: #{tpu_custom_call.1} parent=1 // pred_check
      _
    $region31: #{tpu_custom_call.1} parent=1 // pred_check_branch
      %53 = sbr.rel (0) target = $region33
    $region32: #{tpu_custom_call.1} parent=1 // pred_region
      _
    $region33: #{tpu_custom_call.1} parent=1 // pred_fallthru
      _
    // Predicated region
    $region34: #{tpu_custom_call.1} parent=1 // pred_check
      _
    $region35: #{tpu_custom_call.1} parent=1 // pred_check_branch
      %55 = sbr.rel (0) target = $region37
    $region36: #{tpu_custom_call.1} parent=1 // pred_region
      _
    $region37: #{tpu_custom_call.1} parent=1 // pred_fallthru
      _
    // Predicated region
    $region38: #{tpu_custom_call.1} parent=1 // pred_check
      _
    $region39: #{tpu_custom_call.1} parent=1 // pred_check_branch
      %57 = sbr.rel (0) target = $region41
    $region40: #{tpu_custom_call.1} parent=1 // pred_region
      _
    $region41: #{tpu_custom_call.1} parent=1 // pred_fallthru
      _
    // Predicated region
    $region42: #{tpu_custom_call.1} parent=1 // pred_check
      _
    $region43: #{tpu_custom_call.1} parent=1 // pred_check_branch
      %59 = sbr.rel (0) target = $region45
    $region44: #{tpu_custom_call.1} parent=1 // pred_region
      %60 = dma.done [#allocation3], 2048
    $region45: #{tpu_custom_call.1} parent=1 // pred_fallthru
      _
    // Predicated region
    $region46: #{tpu_custom_call.1} parent=1 // pred_check
      _
    $region47: #{tpu_custom_call.1} parent=1 // pred_check_branch
      %62 = sbr.rel (0) target = $region49
    $region48: #{tpu_custom_call.1} parent=1 // pred_region
      %63 = dma.done [#allocation6], 2048
    $region49: #{tpu_custom_call.1} parent=1 // pred_fallthru
      _
    %v65 = vld [vmem:[%s0] sm:$0xf]
    %v66 = vld [vmem:[%s1] sm:$0xf]
    %v67 = vld [vmem:[%s1 + $0x4] sm:$0xf]
    %v68 = vld [vmem:[%s1 + $0x8] sm:$0xf]
    %v69 = vld [vmem:[%s1 + $0xc] sm:$0xf]
    %v70 = vld [vmem:[%s2] sm:$0x1]
    %v72 = vlaneseq
    %v73 = vshrl.u32 %v72, 7
    %v74 = vsub.s32 0, %v73
    %v75 = vrot.slane %v70, %v74
    %v81 = vunpack.c.l.b16 %v66
    %v82 = vunpack.c.l.b16 %v67
    %v83 = vunpack.c.l.b16 %v68
    %v84 = vunpack.c.l.b16 %v69
    %v85 = vpack.c.b16 %v82, %v81
    %v86 = vpack.c.b16 %v84, %v83
    %vm89 = vcmask 261120
    %v91 = vsel %vm89, %v65, 0
    %93 = vmatprep.subr.bf16.mxu0 0
    %94 = vmatpush1.bf16.msra.mxu0 %v85
    %95 = vmatprep.subr.bf16.mxu0 0
    %96 = vmatpush1.bf16.msra.mxu0 %v86
    %97 = vmatprep.subr.bf16.mxu0 0
    %98 = vmatpush1.bf16.msra.mxu0 0
    %99 = vmatprep.subr.bf16.mxu0 0
    %100 = vmatpush1.bf16.msra.mxu0 0
    %101 = vmatprep.subr.bf16.mxu0 0
    %102 = vmatpush1.bf16.msra.mxu0 0
    %103 = vmatprep.subr.bf16.mxu0 0
    %104 = vmatpush1.bf16.msra.mxu0 0
    %105 = vmatprep.subr.bf16.mxu0 0
    %106 = vmatpush1.bf16.msra.mxu0 0
    %107 = vmatprep.subr.bf16.mxu0 0
    %108 = vmatpush1.bf16.msra.mxu0 0
    %109 = vmatprep.subr.bf16.mxu0 0
    %110 = vmatpush1.bf16.msra.mxu0 0
    %111 = vmatprep.subr.bf16.mxu0 0
    %112 = vmatpush1.bf16.msra.mxu0 0
    %113 = vmatprep.subr.bf16.mxu0 0
    %114 = vmatpush1.bf16.msra.mxu0 0
    %115 = vmatprep.subr.bf16.mxu0 0
    %116 = vmatpush1.bf16.msra.mxu0 0
    %117 = vmatprep.subr.bf16.mxu0 0
    %118 = vmatpush1.bf16.msra.mxu0 0
    %119 = vmatprep.subr.bf16.mxu0 0
    %120 = vmatpush1.bf16.msra.mxu0 0
    %121 = vmatprep.subr.bf16.mxu0 0
    %122 = vmatpush1.bf16.msra.mxu0 0
    %123 = vmatprep.subr.bf16.mxu0 0
    %124 = vmatpush1.bf16.msra.mxu0 0
    %125 = vmatprep.mubr.bf16.mxu0 0
    %126 = vmatmul.mubr.bf16.gmra.mrb[0].mxu0 %v91
    %v127 = vpop.f32.mrb[0].mxu0
    %v128 = vadd.f32 %v75, %v127
    %v129 = vpop.f32.mrb[0].mxu0
    %v130 = vpop.f32.mrb[0].mxu0
    %v131 = vpop.f32.mrb[0].mxu0
    %132 = vdwg.mxu0
    %v133 = vmax.f32 %v128, 0.0
    %v134 = vpack.c.bf16 %v133, %v133
    %v135 = vld [vmem:[#allocation2] sm:$0xff]
    %v136 = vld [vmem:[#allocation2 + $0x8] sm:$0xff]
    %v137 = vld [vmem:[#allocation2 + $0x10] sm:$0xff]
    %v138 = vld [vmem:[#allocation2 + $0x18] sm:$0xff]
    %v139 = vld [vmem:[#allocation2 + $0x20] sm:$0xff]
    %v140 = vld [vmem:[#allocation2 + $0x28] sm:$0xff]
    %v141 = vld [vmem:[#allocation2 + $0x30] sm:$0xff]
    %v142 = vld [vmem:[#allocation2 + $0x38] sm:$0xff]
    %v143 = vld [vmem:[#allocation2 + $0x40] sm:$0xff]
    %v144 = vld [vmem:[#allocation2 + $0x48] sm:$0xff]
    %v145 = vld [vmem:[#allocation2 + $0x50] sm:$0xff]
    %v146 = vld [vmem:[#allocation2 + $0x58] sm:$0xff]
    %v147 = vld [vmem:[#allocation2 + $0x60] sm:$0xff]
    %v148 = vld [vmem:[#allocation2 + $0x68] sm:$0xff]
    %v149 = vld [vmem:[#allocation2 + $0x70] sm:$0xff]
    %v150 = vld [vmem:[#allocation2 + $0x78] sm:$0xff]
    %v151 = vld [vmem:[%s4] sm:$0x3]
    %v153 = vlaneseq
    %v154 = vshrl.u32 %v153, 7
    %v155 = vsub.s32 0, %v154
    %v156 = vrot.slane %v151, %v155
    %v157 = vlaneseq
    %v158 = vshrl.u32 %v157, 7
    %v159 = vsub.s32 1, %v158
    %v160 = vrot.slane %v151, %v159
    %v179 = vunpack.c.l.b16 %v135
    %v180 = vunpack.c.h.b16 %v135
    %v181 = vunpack.c.l.b16 %v136
    %v182 = vunpack.c.h.b16 %v136
    %v183 = vunpack.c.l.b16 %v137
    %v184 = vunpack.c.h.b16 %v137
    %v185 = vunpack.c.l.b16 %v138
    %v186 = vunpack.c.h.b16 %v138
    %v187 = vunpack.c.l.b16 %v139
    %v188 = vunpack.c.h.b16 %v139
    %v189 = vunpack.c.l.b16 %v140
    %v190 = vunpack.c.h.b16 %v140
    %v191 = vunpack.c.l.b16 %v141
    %v192 = vunpack.c.h.b16 %v141
    %v193 = vunpack.c.l.b16 %v142
    %v194 = vunpack.c.h.b16 %v142
    %v195 = vunpack.c.l.b16 %v143
    %v196 = vunpack.c.h.b16 %v143
    %v197 = vunpack.c.l.b16 %v144
    %v198 = vunpack.c.h.b16 %v144
    %v199 = vunpack.c.l.b16 %v145
    %v200 = vunpack.c.h.b16 %v145
    %v201 = vunpack.c.l.b16 %v146
    %v202 = vunpack.c.h.b16 %v146
    %v203 = vunpack.c.l.b16 %v147
    %v204 = vunpack.c.h.b16 %v147
    %v205 = vunpack.c.l.b16 %v148
    %v206 = vunpack.c.h.b16 %v148
    %v207 = vunpack.c.l.b16 %v149
    %v208 = vunpack.c.h.b16 %v149
    %v209 = vunpack.c.l.b16 %v150
    %v210 = vunpack.c.h.b16 %v150
    %v211 = vpack.c.b16 %v181, %v179
    %v212 = vpack.c.b16 %v182, %v180
    %v213 = vpack.c.b16 %v185, %v183
    %v214 = vpack.c.b16 %v186, %v184
    %v215 = vpack.c.b16 %v189, %v187
    %v216 = vpack.c.b16 %v190, %v188
    %v217 = vpack.c.b16 %v193, %v191
    %v218 = vpack.c.b16 %v194, %v192
    %v219 = vpack.c.b16 %v197, %v195
    %v220 = vpack.c.b16 %v198, %v196
    %v221 = vpack.c.b16 %v201, %v199
    %v222 = vpack.c.b16 %v202, %v200
    %v223 = vpack.c.b16 %v205, %v203
    %v224 = vpack.c.b16 %v206, %v204
    %v225 = vpack.c.b16 %v209, %v207
    %v226 = vpack.c.b16 %v210, %v208
    %243 = vmatprep.subr.bf16.mxu0 %v212
    %244 = vmatpush1.bf16.msra.mxu0 %v211
    %245 = vmatprep.subr.bf16.mxu0 %v214
    %246 = vmatpush1.bf16.msra.mxu0 %v213
    %247 = vmatprep.subr.bf16.mxu0 %v216
    %248 = vmatpush1.bf16.msra.mxu0 %v215
    %249 = vmatprep.subr.bf16.mxu0 %v218
    %250 = vmatpush1.bf16.msra.mxu0 %v217
    %251 = vmatprep.subr.bf16.mxu0 %v220
    %252 = vmatpush1.bf16.msra.mxu0 %v219
    %253 = vmatprep.subr.bf16.mxu0 %v222
    %254 = vmatpush1.bf16.msra.mxu0 %v221
    %255 = vmatprep.subr.bf16.mxu0 %v224
    %256 = vmatpush1.bf16.msra.mxu0 %v223
    %257 = vmatprep.subr.bf16.mxu0 %v226
    %258 = vmatpush1.bf16.msra.mxu0 %v225
    %259 = vmatprep.subr.bf16.mxu0 0
    %260 = vmatpush1.bf16.msra.mxu0 0
    %261 = vmatprep.subr.bf16.mxu0 0
    %262 = vmatpush1.bf16.msra.mxu0 0
    %263 = vmatprep.subr.bf16.mxu0 0
    %264 = vmatpush1.bf16.msra.mxu0 0
    %265 = vmatprep.subr.bf16.mxu0 0
    %266 = vmatpush1.bf16.msra.mxu0 0
    %267 = vmatprep.subr.bf16.mxu0 0
    %268 = vmatpush1.bf16.msra.mxu0 0
    %269 = vmatprep.subr.bf16.mxu0 0
    %270 = vmatpush1.bf16.msra.mxu0 0
    %271 = vmatprep.subr.bf16.mxu0 0
    %272 = vmatpush1.bf16.msra.mxu0 0
    %273 = vmatprep.subr.bf16.mxu0 0
    %274 = vmatpush1.bf16.msra.mxu0 0
    %275 = vmatprep.mubr.bf16.mxu0 0
    %276 = vmatmul.mubr.bf16.gmra.mrb[0].mxu0 %v134
    %v277 = vpop.f32.mrb[0].mxu0
    %v278 = vadd.f32 %v156, %v277
    %v279 = vpop.f32.mrb[0].mxu0
    %v280 = vadd.f32 %v160, %v279
    %v281 = vpop.f32.mrb[0].mxu0
    %v282 = vpop.f32.mrb[0].mxu0
    %283 = vdwg.mxu0
    %vm284 = vcmp.ge.f32.partialorder %v278, 0.0
    %vm285 = vcmp.ge.f32.partialorder %v280, 0.0
    %v286 = vmul.f32 %v278, 0.01
    %v287 = vmul.f32 %v280, 0.01
    %v288 = vsel %vm284, %v278, %v286
    %v289 = vsel %vm285, %v280, %v287
    %v290 = vpack.c.bf16 %v288, %v288
    %v291 = vpack.c.bf16 %v289, %v289
    %v292 = vld [vmem:[#allocation5] sm:$0xf]
    %v293 = vld [vmem:[#allocation5 + $0x4] sm:$0xf]
    %v294 = vld [vmem:[#allocation5 + $0x8] sm:$0xf]
    %v295 = vld [vmem:[#allocation5 + $0xc] sm:$0xf]
    %v296 = vld [vmem:[#allocation5 + $0x10] sm:$0xf]
    %v297 = vld [vmem:[#allocation5 + $0x14] sm:$0xf]
    %v298 = vld [vmem:[#allocation5 + $0x18] sm:$0xf]
    %v299 = vld [vmem:[#allocation5 + $0x1c] sm:$0xf]
    %v300 = vld [vmem:[#allocation5 + $0x20] sm:$0xf]
    %v301 = vld [vmem:[#allocation5 + $0x24] sm:$0xf]
    %v302 = vld [vmem:[#allocation5 + $0x28] sm:$0xf]
    %v303 = vld [vmem:[#allocation5 + $0x2c] sm:$0xf]
    %v304 = vld [vmem:[#allocation5 + $0x30] sm:$0xf]
    %v305 = vld [vmem:[#allocation5 + $0x34] sm:$0xf]
    %v306 = vld [vmem:[#allocation5 + $0x38] sm:$0xf]
    %v307 = vld [vmem:[#allocation5 + $0x3c] sm:$0xf]
    %v308 = vld [vmem:[#allocation5 + $0x40] sm:$0xf]
    %v309 = vld [vmem:[#allocation5 + $0x44] sm:$0xf]
    %v310 = vld [vmem:[#allocation5 + $0x48] sm:$0xf]
    %v311 = vld [vmem:[#allocation5 + $0x4c] sm:$0xf]
    %v312 = vld [vmem:[#allocation5 + $0x50] sm:$0xf]
    %v313 = vld [vmem:[#allocation5 + $0x54] sm:$0xf]
    %v314 = vld [vmem:[#allocation5 + $0x58] sm:$0xf]
    %v315 = vld [vmem:[#allocation5 + $0x5c] sm:$0xf]
    %v316 = vld [vmem:[#allocation5 + $0x60] sm:$0xf]
    %v317 = vld [vmem:[#allocation5 + $0x64] sm:$0xf]
    %v318 = vld [vmem:[#allocation5 + $0x68] sm:$0xf]
    %v319 = vld [vmem:[#allocation5 + $0x6c] sm:$0xf]
    %v320 = vld [vmem:[#allocation5 + $0x70] sm:$0xf]
    %v321 = vld [vmem:[#allocation5 + $0x74] sm:$0xf]
    %v322 = vld [vmem:[#allocation5 + $0x78] sm:$0xf]
    %v323 = vld [vmem:[#allocation5 + $0x7c] sm:$0xf]
    %v324 = vld [vmem:[%s6] sm:$0x1]
    %v326 = vlaneseq
    %v327 = vshrl.u32 %v326, 7
    %v328 = vsub.s32 0, %v327
    %v329 = vrot.slane %v324, %v328
    %v363 = vunpack.c.l.b16 %v292
    %v364 = vunpack.c.l.b16 %v293
    %v365 = vunpack.c.l.b16 %v294
    %v366 = vunpack.c.l.b16 %v295
    %v367 = vunpack.c.l.b16 %v296
    %v368 = vunpack.c.l.b16 %v297
    %v369 = vunpack.c.l.b16 %v298
    %v370 = vunpack.c.l.b16 %v299
    %v371 = vunpack.c.l.b16 %v300
    %v372 = vunpack.c.l.b16 %v301
    %v373 = vunpack.c.l.b16 %v302
    %v374 = vunpack.c.l.b16 %v303
    %v375 = vunpack.c.l.b16 %v304
    %v376 = vunpack.c.l.b16 %v305
    %v377 = vunpack.c.l.b16 %v306
    %v378 = vunpack.c.l.b16 %v307
    %v379 = vunpack.c.l.b16 %v308
    %v380 = vunpack.c.l.b16 %v309
    %v381 = vunpack.c.l.b16 %v310
    %v382 = vunpack.c.l.b16 %v311
    %v383 = vunpack.c.l.b16 %v312
    %v384 = vunpack.c.l.b16 %v313
    %v385 = vunpack.c.l.b16 %v314
    %v386 = vunpack.c.l.b16 %v315
    %v387 = vunpack.c.l.b16 %v316
    %v388 = vunpack.c.l.b16 %v317
    %v389 = vunpack.c.l.b16 %v318
    %v390 = vunpack.c.l.b16 %v319
    %v391 = vunpack.c.l.b16 %v320
    %v392 = vunpack.c.l.b16 %v321
    %v393 = vunpack.c.l.b16 %v322
    %v394 = vunpack.c.l.b16 %v323
    %v395 = vpack.c.b16 %v364, %v363
    %v396 = vpack.c.b16 %v366, %v365
    %v397 = vpack.c.b16 %v368, %v367
    %v398 = vpack.c.b16 %v370, %v369
    %v399 = vpack.c.b16 %v372, %v371
    %v400 = vpack.c.b16 %v374, %v373
    %v401 = vpack.c.b16 %v376, %v375
    %v402 = vpack.c.b16 %v378, %v377
    %v403 = vpack.c.b16 %v380, %v379
    %v404 = vpack.c.b16 %v382, %v381
    %v405 = vpack.c.b16 %v384, %v383
    %v406 = vpack.c.b16 %v386, %v385
    %v407 = vpack.c.b16 %v388, %v387
    %v408 = vpack.c.b16 %v390, %v389
    %v409 = vpack.c.b16 %v392, %v391
    %v410 = vpack.c.b16 %v394, %v393
    %427 = vmatprep.subr.bf16.mxu0 0
    %428 = vmatpush1.bf16.msra.mxu0 %v395
    %429 = vmatprep.subr.bf16.mxu0 0
    %430 = vmatpush1.bf16.msra.mxu0 %v396
    %431 = vmatprep.subr.bf16.mxu0 0
    %432 = vmatpush1.bf16.msra.mxu0 %v397
    %433 = vmatprep.subr.bf16.mxu0 0
    %434 = vmatpush1.bf16.msra.mxu0 %v398
    %435 = vmatprep.subr.bf16.mxu0 0
    %436 = vmatpush1.bf16.msra.mxu0 %v399
    %437 = vmatprep.subr.bf16.mxu0 0
    %438 = vmatpush1.bf16.msra.mxu0 %v400
    %439 = vmatprep.subr.bf16.mxu0 0
    %440 = vmatpush1.bf16.msra.mxu0 %v401
    %441 = vmatprep.subr.bf16.mxu0 0
    %442 = vmatpush1.bf16.msra.mxu0 %v402
    %443 = vmatprep.subr.bf16.mxu0 0
    %444 = vmatpush1.bf16.msra.mxu0 %v403
    %445 = vmatprep.subr.bf16.mxu0 0
    %446 = vmatpush1.bf16.msra.mxu0 %v404
    %447 = vmatprep.subr.bf16.mxu0 0
    %448 = vmatpush1.bf16.msra.mxu0 %v405
    %449 = vmatprep.subr.bf16.mxu0 0
    %450 = vmatpush1.bf16.msra.mxu0 %v406
    %451 = vmatprep.subr.bf16.mxu0 0
    %452 = vmatpush1.bf16.msra.mxu0 %v407
    %453 = vmatprep.subr.bf16.mxu0 0
    %454 = vmatpush1.bf16.msra.mxu0 %v408
    %455 = vmatprep.subr.bf16.mxu0 0
    %456 = vmatpush1.bf16.msra.mxu0 %v409
    %457 = vmatprep.subr.bf16.mxu0 0
    %458 = vmatpush1.bf16.msra.mxu0 %v410
    %459 = vmatprep.mubr.bf16.mxu0 %v291
    %460 = vmatmul.mubr.bf16.gmra.mrb[0].mxu0 %v290
    %v461 = vpop.f32.mrb[0].mxu0
    %v462 = vadd.f32 %v329, %v461
    %v463 = vpop.f32.mrb[0].mxu0
    %v464 = vpop.f32.mrb[0].mxu0
    %v465 = vpop.f32.mrb[0].mxu0
    %466 = vdwg.mxu0
    %vm467 = vcmp.ge.f32.partialorder %v462, 0.0
    %v468 = vmul.f32 %v462, 0.01
    %v469 = vsel %vm467, %v462, %v468
    %v470 = vpack.c.bf16 %v469, %v469
    %v471 = vld [vmem:[%s7] sm:$0xf]
    %v472 = vld [vmem:[%s7 + $0x4] sm:$0xf]
    %v473 = vld [vmem:[%s7 + $0x8] sm:$0xf]
    %v474 = vld [vmem:[%s7 + $0xc] sm:$0xf]
    %v475 = vld [vmem:[%s7 + $0x10] sm:$0xf]
    %v476 = vld [vmem:[%s7 + $0x14] sm:$0xf]
    %v477 = vld [vmem:[%s7 + $0x18] sm:$0xf]
    %v478 = vld [vmem:[%s7 + $0x1c] sm:$0xf]
    %v479 = vld [vmem:[%s7 + $0x20] sm:$0xf]
    %v480 = vld [vmem:[%s7 + $0x24] sm:$0xf]
    %v481 = vld [vmem:[%s7 + $0x28] sm:$0xf]
    %v482 = vld [vmem:[%s7 + $0x2c] sm:$0xf]
    %v483 = vld [vmem:[%s7 + $0x30] sm:$0xf]
    %v484 = vld [vmem:[%s7 + $0x34] sm:$0xf]
    %v485 = vld [vmem:[%s7 + $0x38] sm:$0xf]
    %v486 = vld [vmem:[%s7 + $0x3c] sm:$0xf]
    %v487 = vld [vmem:[%s8] sm:$0x1]
    %v489 = vlaneseq
    %v490 = vshrl.u32 %v489, 7
    %v491 = vsub.s32 0, %v490
    %v492 = vrot.slane %v487, %v491
    %v510 = vunpack.c.l.b16 %v471
    %v511 = vunpack.c.l.b16 %v472
    %v512 = vunpack.c.l.b16 %v473
    %v513 = vunpack.c.l.b16 %v474
    %v514 = vunpack.c.l.b16 %v475
    %v515 = vunpack.c.l.b16 %v476
    %v516 = vunpack.c.l.b16 %v477
    %v517 = vunpack.c.l.b16 %v478
    %v518 = vunpack.c.l.b16 %v479
    %v519 = vunpack.c.l.b16 %v480
    %v520 = vunpack.c.l.b16 %v481
    %v521 = vunpack.c.l.b16 %v482
    %v522 = vunpack.c.l.b16 %v483
    %v523 = vunpack.c.l.b16 %v484
    %v524 = vunpack.c.l.b16 %v485
    %v525 = vunpack.c.l.b16 %v486
    %v526 = vpack.c.b16 %v511, %v510
    %v527 = vpack.c.b16 %v513, %v512
    %v528 = vpack.c.b16 %v515, %v514
    %v529 = vpack.c.b16 %v517, %v516
    %v530 = vpack.c.b16 %v519, %v518
    %v531 = vpack.c.b16 %v521, %v520
    %v532 = vpack.c.b16 %v523, %v522
    %v533 = vpack.c.b16 %v525, %v524
    %542 = vmatprep.subr.bf16.mxu0 0
    %543 = vmatpush1.bf16.msra.mxu0 %v526
    %544 = vmatprep.subr.bf16.mxu0 0
    %545 = vmatpush1.bf16.msra.mxu0 %v527
    %546 = vmatprep.subr.bf16.mxu0 0
    %547 = vmatpush1.bf16.msra.mxu0 %v528
    %548 = vmatprep.subr.bf16.mxu0 0
    %549 = vmatpush1.bf16.msra.mxu0 %v529
    %550 = vmatprep.subr.bf16.mxu0 0
    %551 = vmatpush1.bf16.msra.mxu0 %v530
    %552 = vmatprep.subr.bf16.mxu0 0
    %553 = vmatpush1.bf16.msra.mxu0 %v531
    %554 = vmatprep.subr.bf16.mxu0 0
    %555 = vmatpush1.bf16.msra.mxu0 %v532
    %556 = vmatprep.subr.bf16.mxu0 0
    %557 = vmatpush1.bf16.msra.mxu0 %v533
    %558 = vmatprep.subr.bf16.mxu0 0
    %559 = vmatpush1.bf16.msra.mxu0 0
    %560 = vmatprep.subr.bf16.mxu0 0
    %561 = vmatpush1.bf16.msra.mxu0 0
    %562 = vmatprep.subr.bf16.mxu0 0
    %563 = vmatpush1.bf16.msra.mxu0 0
    %564 = vmatprep.subr.bf16.mxu0 0
    %565 = vmatpush1.bf16.msra.mxu0 0
    %566 = vmatprep.subr.bf16.mxu0 0
    %567 = vmatpush1.bf16.msra.mxu0 0
    %568 = vmatprep.subr.bf16.mxu0 0
    %569 = vmatpush1.bf16.msra.mxu0 0
    %570 = vmatprep.subr.bf16.mxu0 0
    %571 = vmatpush1.bf16.msra.mxu0 0
    %572 = vmatprep.subr.bf16.mxu0 0
    %573 = vmatpush1.bf16.msra.mxu0 0
    %574 = vmatprep.mubr.bf16.mxu0 0
    %575 = vmatmul.mubr.bf16.gmra.mrb[0].mxu0 %v470
    %v576 = vpop.f32.mrb[0].mxu0
    %v577 = vadd.f32 %v492, %v576
    %v578 = vpop.f32.mrb[0].mxu0
    %v579 = vpop.f32.mrb[0].mxu0
    %v580 = vpop.f32.mrb[0].mxu0
    %581 = vdwg.mxu0
    %vm582 = vcmask 64512
    %v583 = vsel %vm582, %v577, -inf
    %584 = vmax.xlane.f32.xlu0 %v583
    %v585 = vpop.xlane.xlu0 %584
    %v586 = vsub.f32 %v577, %v585
    %v587 = vmul.f32 %v586, 1.442695
    %v588 = vpow.pop %v587
    %v589 = vsel %vm582, %v588, 0.0
    %590 = vadd.xlane.f32.xlu0 %v589
    %v591 = vpop.xlane.xlu0 %590
    %v592 = vrcp.pop %v591
    %v593 = vmul.f32 %v588, %v592
    %v594 = vld [vmem:[%s9] sm:$0xff]
    %v595 = vadd.f32 %v593, %v594
    %v596 = vsel %vm582, %v595, -inf
    %597 = vmax.xlane.f32.xlu0 %v596
    %v598 = vpop.xlane.xlu0 %597
    %v599 = vsub.f32 %v595, %v598
    %v600 = vmul.f32 %v599, 1.442695
    %v601 = vpow.pop %v600
    %v602 = vsel %vm582, %v601, 0.0
    %603 = vadd.xlane.f32.xlu0 %v602
    %v604 = vpop.xlane.xlu0 %603
    %v605 = vrcp.pop %v604
    %v606 = vmul.f32 %v601, %v605
    %607 = vst.msk [vmem:[#allocation7] sm:$0xff] %vm582, %v606
    // Predicated region
    $region50: #{tpu_custom_call.1} parent=1 // pred_check
      _
    $region51: #{tpu_custom_call.1} parent=1 // pred_check_branch
      %609 = sbr.rel (0) target = $region53
    $region52: #{tpu_custom_call.1} parent=1 // pred_region
      %s611 = ssub.s32 128, 128
      %612 = vsyncadd [#allocation4], %s611
      %s614 = sshll.u32 [#allocation7], 4
      %s615 = int_to_ptr.vmem [resolvable:$true] %s614
      %617 = dma.vmem_to_hbm [thread:$0]  %s615, 128, %s10, [#allocation4]
    $region53: #{tpu_custom_call.1} parent=1 // pred_fallthru
      _
    // Predicated region
    $region54: #{tpu_custom_call.1} parent=1 // pred_check
      _
    $region55: #{tpu_custom_call.1} parent=1 // pred_check_branch
      %619 = sbr.rel (0) target = $region57
    $region56: #{tpu_custom_call.1} parent=1 // pred_region
      %620 = dma.done [#allocation4], 128
    $region57: #{tpu_custom_call.1} parent=1 // pred_fallthru
      _
    %621 = vsyncpa [#allocation3], 1
    %622 = vsyncpa [#allocation6], 1
    %623 = vsyncpa [#allocation4], 1

</llo_original>
